<compile_context>
chip_gen: v6e
topology: v6e:2x2x1
jax: 0.10.0
libtpu: 0.0.40
codegen_flags: <defaults>
</compile_context>

<pallas_src>
import functools

import jax
import jax.numpy as jnp
from jax.experimental import pallas as pl
from jax.experimental.pallas import tpu as pltpu

LANE = 128          # lane width
MAX_TILE_M = 4096   # rows per grid step: 4096*128*4B = 2 MiB per f32 input block


def _pow_weight(one_minus_pt, gamma):
    """(1 - pt)**gamma, avoiding the exp/log pow lowering for small integer gamma."""
    g = float(gamma)
    if g == 0.0:
        return jnp.ones_like(one_minus_pt)
    if g == int(g) and 1.0 <= g <= 8.0:
        w = one_minus_pt
        for _ in range(int(g) - 1):
            w = w * one_minus_pt
        return w
    return one_minus_pt ** jnp.float32(g)


def _bfocal_kernel(p_ref, t_ref, o_ref, *, gamma, n_inner, tile_m, rows,
                   exact_cover, binary_targets):
    i = pl.program_id(0)   # parallel (megacore) axis
    j = pl.program_id(1)   # reduction (inner) axis

    @pl.when(j == 0)
    def _():
        o_ref[...] = jnp.zeros_like(o_ref)

    p = p_ref[...].astype(jnp.float32)
    t = t_ref[...].astype(jnp.float32)

    if binary_targets:
        # Valid only for t in {0, 1}: one log instead of log + log1p + exp.
        pt = t * p + (1.0 - t) * (1.0 - p)
        ce = jnp.minimum(-jnp.log(pt), jnp.float32(100.0))
        one_minus_pt = 1.0 - pt
    else:
        # Exact PyTorch binary_cross_entropy semantics: clamp log terms at -100
        # BEFORE multiplying by t / (1-t)  (avoids 0 * -inf = NaN).
        neg_clamp = jnp.float32(-100.0)
        log_p = jnp.maximum(jnp.log(p), neg_clamp)
        log_1mp = jnp.maximum(jnp.log1p(-p), neg_clamp)
        ce = -(t * log_p + (1.0 - t) * log_1mp)
        one_minus_pt = 1.0 - jnp.exp(-ce)

    # alpha is folded into the wrapper-side scalar scale.
    f_loss = _pow_weight(one_minus_pt, gamma) * ce

    def accumulate(x):
        tm = x.shape[0]
        # Leading-axis reduction only: pure VPU adds into the resident (8,128) output.
        o_ref[...] += jnp.sum(x.reshape(tm // 8, 8, LANE), axis=0)

    if exact_cover:
        # Grid exactly covers the rows: every block is fully valid, no masking.
        accumulate(f_loss)
    else:
        g = i * n_inner + j                      # unclamped global block index
        block_is_full = (g + 1) * tile_m <= rows

        @pl.when(block_is_full)
        def _():
            accumulate(f_loss)

        @pl.when(jnp.logical_not(block_is_full))
        def _():
            # Partial (or fully over-cover) block: zero invalid rows via select, so any
            # stale/garbage VMEM contents (even NaN) contribute exactly 0.
            valid = rows - g * tile_m
            row_ids = jax.lax.broadcasted_iota(jnp.int32, (f_loss.shape[0], 1), 0)
            accumulate(jnp.where(row_ids < valid, f_loss, jnp.float32(0.0)))


def bfocal_loss(inputs, targets, alpha=1.0, gamma=2.0, binary_targets=False):
    """BFocalLoss(alpha, gamma, logits=False, reduce=True).forward(inputs, targets).

    Set binary_targets=True only when targets are exactly 0/1 (enables the 1-log fast
    path); soft targets must use the default exact path.
    """
    assert inputs.shape == targets.shape
    n_total = int(inputs.size)
    assert n_total > 0

    # Keep native dtype (e.g. bf16 / int8 targets) in HBM; the kernel casts to f32.
    p_flat = jnp.ravel(inputs)
    t_flat = jnp.ravel(targets)

    # Zero-copy lane-dense layout: reshape to (rows, 128).  Only when n_total is not a
    # multiple of 128 (or the array is tiny, < 8 rows) do we pad with (p=1, t=1), which
    # contributes exactly 0 (ce = 0, 1-pt = 0).  Row/tile raggedness is masked in-kernel.
    lane_pad = (-n_total) % LANE
    rows = (n_total + lane_pad) // LANE
    row_pad = (8 - rows) * LANE if rows < 8 else 0
    pad = lane_pad + row_pad
    if pad:
        p_flat = jnp.concatenate([p_flat, jnp.ones((pad,), p_flat.dtype)])
        t_flat = jnp.concatenate([t_flat, jnp.ones((pad,), t_flat.dtype)])
        rows = (n_total + pad) // LANE
    p2 = p_flat.reshape(rows, LANE)
    t2 = t_flat.reshape(rows, LANE)

    # Tile rows: big (2 MiB) blocks for large inputs; for small inputs the largest
    # sublane-aligned tile not exceeding rows (the ragged remainder is masked in-kernel).
    if rows >= MAX_TILE_M:
        tile_m = MAX_TILE_M
    elif rows >= 32:
        tile_m = (rows // 32) * 32
    elif rows >= 16:
        tile_m = (rows // 16) * 16
    else:
        tile_m = (rows // 8) * 8

    n_blocks = pl.cdiv(rows, tile_m)
    # Split across the 2 TensorCores on v7x only when each shard gets >= 2 real blocks;
    # harmless no-op on 1-TC v5e/v6e.
    n_outer = 2 if n_blocks >= 4 else 1
    n_inner = pl.cdiv(n_blocks, n_outer)
    exact_cover = (n_outer * n_inner * tile_m == rows)

    if n_outer * n_inner == n_blocks:
        def block_map(i, j):
            return (i * n_inner + j, 0)
    else:
        last_block = n_blocks - 1

        def block_map(i, j):
            # Clamp over-cover grid steps to the last real block; their contribution is
            # fully masked to 0 in-kernel.
            return (jnp.minimum(i * n_inner + j, last_block), 0)

    partial = pl.pallas_call(
        functools.partial(
            _bfocal_kernel,
            gamma=float(gamma),
            n_inner=n_inner,
            tile_m=tile_m,
            rows=rows,
            exact_cover=exact_cover,
            binary_targets=bool(binary_targets),
        ),
        out_shape=jax.ShapeDtypeStruct((n_outer * 8, LANE), jnp.float32),
        grid_spec=pltpu.PrefetchScalarGridSpec(
            num_scalar_prefetch=0,
            grid=(n_outer, n_inner),
            in_specs=[
                pl.BlockSpec((tile_m, LANE), block_map),
                pl.BlockSpec((tile_m, LANE), block_map),
            ],
            out_specs=pl.BlockSpec((8, LANE), lambda i, j: (i, 0)),
        ),
        compiler_params=pltpu.CompilerParams(
            dimension_semantics=("parallel", "arbitrary"),
            # 2 inputs x 2 buffers x 2 MiB = 8 MiB of streamed blocks plus elementwise
            # temporaries; raise above v5e's 16 MiB default scoped limit, well under the
            # physical VMEM of every generation (incl. v7x's 64 MiB).
            vmem_limit_bytes=40 * 1024 * 1024,
        ),
    )(p2, t2)

    # TODO(synk): reduce=False (per-element output) path not exposed; kernel implements
    # the default reduce=True mean reduction.
    return jnp.sum(partial) * jnp.float32(float(alpha) / float(n_total))


def _bfocal_loss_ref(inputs, targets, alpha=1.0, gamma=2.0):
    p = inputs.astype(jnp.float32)
    t = targets.astype(jnp.float32)
    ce = -(t * jnp.maximum(jnp.log(p), -100.0)
           + (1.0 - t) * jnp.maximum(jnp.log1p(-p), -100.0))
    pt = jnp.exp(-ce)
    return jnp.mean(alpha * (1.0 - pt) ** gamma * ce)


if __name__ == "__main__":
    key = jax.random.PRNGKey(0)
    k_p, k_t = jax.random.split(key)

    # Test 1: small, lane-aligned (2048 elems -> 16 rows, single exact tile, no padding).
    B, C, H, W = 2, 4, 16, 16   # logits=False -> inputs are probabilities in (0, 1)
    inputs = jax.random.uniform(k_p, (B, C, H, W), jnp.float32, minval=0.02, maxval=0.98)
    targets = jax.random.bernoulli(k_t, 0.5, (B, C, H, W)).astype(jnp.float32)
    loss = jax.block_until_ready(bfocal_loss(inputs, targets, alpha=1.0, gamma=2.0))
    ref = _bfocal_loss_ref(inputs, targets, 1.0, 2.0)
    assert jnp.allclose(loss, ref, rtol=1e-5, atol=1e-6), (loss, ref)

    # Test 1b: binary-target fast path (1 transcendental/element) on the same data.
    loss_b = jax.block_until_ready(
        bfocal_loss(inputs, targets, alpha=1.0, gamma=2.0, binary_targets=True))
    assert jnp.allclose(loss_b, ref, rtol=1e-4, atol=1e-6), (loss_b, ref)

    # Test 2: larger lane-aligned input, alpha != 1, single big exact tile, zero-copy path.
    k_p2, k_t2 = jax.random.split(k_p)
    shape2 = (4, 8, 96, 112)
    inputs2 = jax.random.uniform(k_p2, shape2, jnp.float32, minval=1e-4, maxval=1.0 - 1e-4)
    targets2 = jax.random.bernoulli(k_t2, 0.3, shape2).astype(jnp.float32)
    loss2 = jax.block_until_ready(bfocal_loss(inputs2, targets2, alpha=0.25, gamma=2.0))
    ref2 = _bfocal_loss_ref(inputs2, targets2, 0.25, 2.0)
    assert jnp.allclose(loss2, ref2, rtol=1e-4, atol=1e-6), (loss2, ref2)

    # Test 3: non-128-divisible size with multiple tiles: exercises the small lane-pad
    # fallback, the in-kernel partial-block mask, the clamped over-cover block, and the
    # 2-way "parallel" outer split.
    k_p3, k_t3 = jax.random.split(k_t)
    shape3 = (4, 4, 363, 363)
    inputs3 = jax.random.uniform(k_p3, shape3, jnp.float32, minval=1e-3, maxval=1.0 - 1e-3)
    targets3 = jax.random.bernoulli(k_t3, 0.5, shape3).astype(jnp.float32)
    loss3 = jax.block_until_ready(bfocal_loss(inputs3, targets3, alpha=1.0, gamma=2.0))
    ref3 = _bfocal_loss_ref(inputs3, targets3, 1.0, 2.0)
    assert jnp.allclose(loss3, ref3, rtol=1e-4, atol=1e-6), (loss3, ref3)

    print("KERNEL_OK")
</pallas_src>

<mosaic_0001>
module attributes {stable_mosaic.version = 11 : i64} {
  func.func @_bfocal_kernel(%arg0: i32, %arg1: i32, %arg2: memref<16x128xf32, #tpu.memory_space<vmem>>, %arg3: memref<16x128xf32, #tpu.memory_space<vmem>>, %arg4: memref<8x128xf32, #tpu.memory_space<vmem>>) attributes {dimension_semantics = [#tpu.dimension_semantics<parallel>, #tpu.dimension_semantics<arbitrary>], iteration_bounds = array<i64: 1, 1>, scalar_prefetch = 0 : i64, scratch_operands = 0 : i64, tpu.core_type = #tpu.core_type<tc>, window_params = [{transform_indices = @transform_0, window_bounds = array<i64: 16, 128>}, {transform_indices = @transform_1, window_bounds = array<i64: 16, 128>}, {transform_indices = @transform_2, window_bounds = array<i64: 8, 128>}]} {
    %c0_i32 = arith.constant 0 : i32
    %0 = arith.cmpi eq, %arg1, %c0_i32 : i32
    %1 = arith.extui %0 : i1 to i32
    %c0_i32_0 = arith.constant 0 : i32
    %2 = arith.cmpi ne, %1, %c0_i32_0 : i32
    scf.if %2 {
      %cst_15 = arith.constant 0.000000e+00 : f32
      %32 = vector.broadcast %cst_15 : f32 to vector<8x128xf32>
      %c0_16 = arith.constant 0 : index
      %c0_17 = arith.constant 0 : index
      %33 = vector.load %arg4[%c0_16, %c0_17] : memref<8x128xf32, #tpu.memory_space<vmem>>, vector<8x128xf32>
      tpu.vector_store %arg4[%c0_16, %c0_17], %32 {strides = array<i32>} : memref<8x128xf32, #tpu.memory_space<vmem>>, vector<8x128xf32>,
    } else {
    }
    %c0 = arith.constant 0 : index
    %c0_1 = arith.constant 0 : index
    %3 = vector.load %arg2[%c0, %c0_1] : memref<16x128xf32, #tpu.memory_space<vmem>>, vector<16x128xf32>
    %c0_2 = arith.constant 0 : index
    %c0_3 = arith.constant 0 : index
    %4 = vector.load %arg3[%c0_2, %c0_3] : memref<16x128xf32, #tpu.memory_space<vmem>>, vector<16x128xf32>
    %5 = math.log %3 : vector<16x128xf32>
    %cst = arith.constant -1.000000e+02 : f32
    %6 = vector.broadcast %cst : f32 to vector<16x128xf32>
    %7 = arith.maximumf %5, %6 : vector<16x128xf32>
    %cst_4 = arith.constant 0.000000e+00 : f32
    %8 = vector.broadcast %cst_4 : f32 to vector<16x128xf32>
    %9 = arith.subf %8, %3 : vector<16x128xf32>
    %10 = math.log1p %9 : vector<16x128xf32>
    %cst_5 = arith.constant -1.000000e+02 : f32
    %11 = vector.broadcast %cst_5 : f32 to vector<16x128xf32>
    %12 = arith.maximumf %10, %11 : vector<16x128xf32>
    %13 = arith.mulf %4, %7 : vector<16x128xf32>
    %cst_6 = arith.constant 1.000000e+00 : f32
    %14 = vector.broadcast %cst_6 : f32 to vector<16x128xf32>
    %15 = arith.subf %14, %4 : vector<16x128xf32>
    %16 = arith.mulf %15, %12 : vector<16x128xf32>
    %17 = arith.addf %13, %16 : vector<16x128xf32>
    %cst_7 = arith.constant 0.000000e+00 : f32
    %18 = vector.broadcast %cst_7 : f32 to vector<16x128xf32>
    %19 = arith.subf %18, %17 : vector<16x128xf32>
    %cst_8 = arith.constant 0.000000e+00 : f32
    %20 = vector.broadcast %cst_8 : f32 to vector<16x128xf32>
    %21 = arith.subf %20, %19 : vector<16x128xf32>
    %22 = math.exp %21 : vector<16x128xf32>
    %cst_9 = arith.constant 1.000000e+00 : f32
    %23 = vector.broadcast %cst_9 : f32 to vector<16x128xf32>
    %24 = arith.subf %23, %22 : vector<16x128xf32>
    %25 = arith.mulf %24, %24 : vector<16x128xf32>
    %26 = arith.mulf %25, %19 : vector<16x128xf32>
    %c0_10 = arith.constant 0 : index
    %c0_11 = arith.constant 0 : index
    %27 = vector.load %arg4[%c0_10, %c0_11] : memref<8x128xf32, #tpu.memory_space<vmem>>, vector<8x128xf32>
    %28 = vector.shape_cast %26 : vector<16x128xf32> to vector<2x8x128xf32>
    %cst_12 = arith.constant dense<0.000000e+00> : vector<8x128xf32>
    %29 = vector.multi_reduction <add>, %28, %cst_12 [0] : vector<2x8x128xf32> to vector<8x128xf32>
    %30 = arith.addf %27, %29 : vector<8x128xf32>
    %c0_13 = arith.constant 0 : index
    %c0_14 = arith.constant 0 : index
    %31 = vector.load %arg4[%c0_13, %c0_14] : memref<8x128xf32, #tpu.memory_space<vmem>>, vector<8x128xf32>
    tpu.vector_store %arg4[%c0_13, %c0_14], %30 {strides = array<i32>} : memref<8x128xf32, #tpu.memory_space<vmem>>, vector<8x128xf32>,
    return
  }
  func.func @transform_0(%arg0: i32, %arg1: i32) -> (i32, i32) {
    %c1_i32 = arith.constant 1 : i32
    %0 = arith.muli %arg0, %c1_i32 : i32
    %1 = arith.addi %0, %arg1 : i32
    %c0_i32 = arith.constant 0 : i32
    %c0_i32_0 = arith.constant 0 : i32
    return %1, %c0_i32 : i32, i32
  }
  func.func @transform_1(%arg0: i32, %arg1: i32) -> (i32, i32) {
    %c1_i32 = arith.constant 1 : i32
    %0 = arith.muli %arg0, %c1_i32 : i32
    %1 = arith.addi %0, %arg1 : i32
    %c0_i32 = arith.constant 0 : i32
    %c0_i32_0 = arith.constant 0 : i32
    return %1, %c0_i32 : i32, i32
  }
  func.func @transform_2(%arg0: i32, %arg1: i32) -> (i32, i32) {
    %c0_i32 = arith.constant 0 : i32
    %c0_i32_0 = arith.constant 0 : i32
    return %arg0, %c0_i32 : i32, i32
  }
}

</mosaic_0001>

<llo_original>
// kernel: tpu_custom_call.1
$region0: #{tpu_custom_call.1}
  #allocation0 [shape = 'u32[]', space=smem, size = 0x4, offset = 0x4, fixed_abs, tag = 'smem constant byte address 0x4 - core index']
  #allocation1 [shape = 'u32[144,128]{1,0:T(1,128)}', space=vmem, size = 0x12000, scoped, tag = 'internal scratch']
  %s0 = inlined_call_operand.hbm [shape: f32[16,128], index: 0, kind: input, shape index: {}]
  %s1 = inlined_call_operand.hbm [shape: f32[16,128], index: 1, kind: input, shape index: {}]
  %s2 = inlined_call_operand.hbm [shape: f32[8,128], index: 2, kind: output, shape index: {}]
  %s3 = sld [smem:[#allocation0]]
  $region30: #{tpu_custom_call.1} parent=0
    _
  %s5 = ssub.s32 1, %s3
  %s6 = scalar_select 0, %s5, %s3
  $region1: #{tpu_custom_call.1} parent=0
    #allocation2 [shape = 'u8[8192]{0}', space=vmem, size = 0x2000, scoped, tag = 'input window, operand 0, single buffered']
    #allocation3 [shape = 's32[1]{0}', space=sflag, size = 0x4, scoped, tag = 'scoped memory for tpu_custom_call.1']
    #allocation4 [shape = 's32[1]{0}', space=sflag, size = 0x4, scoped, tag = 'scoped memory for tpu_custom_call.1']
    #allocation5 [shape = 'u8[8192]{0}', space=vmem, size = 0x2000, scoped, tag = 'input window, operand 1, single buffered']
    #allocation6 [shape = 's32[1]{0}', space=sflag, size = 0x4, scoped, tag = 'scoped memory for tpu_custom_call.1']
    #allocation7 [shape = 'u8[4096]{0}', space=vmem, size = 0x1000, scoped, tag = 'output window, operand 0, single buffered']
    %7 = vsyncpa [#allocation3], 0
    %8 = vsyncpa [#allocation6], 0
    %9 = vsyncpa [#allocation4], 0
    // Predicated region
    $region2: #{tpu_custom_call.1} parent=1 // pred_check
      _
    $region3: #{tpu_custom_call.1} parent=1 // pred_check_branch
      %11 = sbr.rel (0) target = $region5
    $region4: #{tpu_custom_call.1} parent=1 // pred_region
      %s12 = sadd.s32 0, 0
      %s13 = smul.u32 2, %s12
      %s15 = ssub.s32 256, 256
      %16 = vsyncadd [#allocation3], %s15
      %s17 = smul.addr %s13, 128
      %s18 = scalar_lea.hbm %s0, %s17
      %s19 = sshll.u32 [#allocation2], 4
      %s20 = int_to_ptr.vmem [resolvable:$true] %s19
      %25 = dma.hbm_to_vmem [thread:$0]  %s18, 256, %s20, [#allocation3], 128, 128, 8
    $region5: #{tpu_custom_call.1} parent=1 // pred_fallthru
      _
    // Predicated region
    $region6: #{tpu_custom_call.1} parent=1 // pred_check
      _
    $region7: #{tpu_custom_call.1} parent=1 // pred_check_branch
      %27 = sbr.rel (0) target = $region9
    $region8: #{tpu_custom_call.1} parent=1 // pred_region
      %s28 = sadd.s32 0, 0
      %s29 = smul.u32 2, %s28
      %s31 = ssub.s32 256, 256
      %32 = vsyncadd [#allocation6], %s31
      %s33 = smul.addr %s29, 128
      %s34 = scalar_lea.hbm %s1, %s33
      %s35 = sshll.u32 [#allocation5], 4
      %s36 = int_to_ptr.vmem [resolvable:$true] %s35
      %41 = dma.hbm_to_vmem [thread:$0]  %s34, 256, %s36, [#allocation6], 128, 128, 8
    $region9: #{tpu_custom_call.1} parent=1 // pred_fallthru
      _
    // Predicated region
    $region10: #{tpu_custom_call.1} parent=1 // pred_check
      _
    $region11: #{tpu_custom_call.1} parent=1 // pred_check_branch
      %43 = sbr.rel (0) target = $region13
    $region12: #{tpu_custom_call.1} parent=1 // pred_region
      %44 = dma.done [#allocation3], 256
    $region13: #{tpu_custom_call.1} parent=1 // pred_fallthru
      _
    // Predicated region
    $region14: #{tpu_custom_call.1} parent=1 // pred_check
      _
    $region15: #{tpu_custom_call.1} parent=1 // pred_check_branch
      %46 = sbr.rel (0) target = $region17
    $region16: #{tpu_custom_call.1} parent=1 // pred_region
      %47 = dma.done [#allocation6], 256
    $region17: #{tpu_custom_call.1} parent=1 // pred_fallthru
      _
    %s48 = sadd.s32 0, 0
    %s49 = smul.u32 2, %s48
    %s50 = sadd.s32 0, 0
    %s51 = smul.u32 2, %s50
    %p52 = scmp.eq.s32.totalorder 0, 0
    // Predicated region
    $region18: #{tpu_custom_call.1} parent=1 // pred_check
      %p53 = pneg %p52
    $region19: #{tpu_custom_call.1} parent=1 // pred_check_branch
      %55 = sbr.rel (%p53) target = $region21
    $region20: #{tpu_custom_call.1} parent=1 // pred_region
      %56 = vst [vmem:[#allocation7] sm:$0xff] 0.0
    $region21: #{tpu_custom_call.1} parent=1 // pred_fallthru
      _
    %v57 = vld [vmem:[#allocation2] sm:$0xff]
    %v58 = vld [vmem:[#allocation2 + $0x8] sm:$0xff]
    %v59 = vld [vmem:[#allocation5] sm:$0xff]
    %v60 = vld [vmem:[#allocation5 + $0x8] sm:$0xff]
    %v61 = vlog2.pop %v57
    %v62 = vmul.f32 %v61, 0.6931472
    %v63 = vlog2.pop %v58
    %v64 = vmul.f32 %v63, 0.6931472
    %v65 = vmax.f32 %v62, -100.0
    %v66 = vmax.f32 %v64, -100.0
    %v67 = vsub.f32 0.0, %v57
    %v68 = vsub.f32 0.0, %v58
    %v69 = vadd.f32 %v67, 1.0
    %v70 = vlog2.pop %v69
    %v71 = vmul.f32 %v70, 0.6931472
    %v72 = vmul.f32 -0.5, %v67
    %v73 = vadd.f32 %v72, 1.0
    %v74 = vmul.f32 %v73, %v67
    %v75 = vand.u32 2147483647, %v67
    %vm76 = vcmp.lt.f32.partialorder %v75, 0.0004427343
    %v77 = vsel %vm76, %v74, %v71
    %v78 = vadd.f32 %v68, 1.0
    %v79 = vlog2.pop %v78
    %v80 = vmul.f32 %v79, 0.6931472
    %v81 = vmul.f32 -0.5, %v68
    %v82 = vadd.f32 %v81, 1.0
    %v83 = vmul.f32 %v82, %v68
    %v84 = vand.u32 2147483647, %v68
    %vm85 = vcmp.lt.f32.partialorder %v84, 0.0004427343
    %v86 = vsel %vm85, %v83, %v80
    %v87 = vmax.f32 %v77, -100.0
    %v88 = vmax.f32 %v86, -100.0
    %v89 = vmul.f32 %v59, %v65
    %v90 = vmul.f32 %v60, %v66
    %v91 = vsub.f32 1.0, %v59
    %v92 = vsub.f32 1.0, %v60
    %v93 = vmul.f32 %v91, %v87
    %v94 = vmul.f32 %v92, %v88
    %v95 = vadd.f32 %v89, %v93
    %v96 = vadd.f32 %v90, %v94
    %v97 = vsub.f32 0.0, %v95
    %v98 = vsub.f32 0.0, %v96
    %v99 = vsub.f32 0.0, %v97
    %v100 = vsub.f32 0.0, %v98
    %v101 = vmul.f32 %v99, 1.442695
    %v102 = vpow.pop %v101
    %v103 = vmul.f32 %v100, 1.442695
    %v104 = vpow.pop %v103
    %v105 = vsub.f32 1.0, %v102
    %v106 = vsub.f32 1.0, %v104
    %v107 = vmul.f32 %v105, %v105
    %v108 = vmul.f32 %v106, %v106
    %v109 = vmul.f32 %v107, %v97
    %v110 = vmul.f32 %v108, %v98
    %v111 = vld [vmem:[#allocation7] sm:$0xff]
    %v112 = vadd.f32 %v109, %v110
    %v113 = vadd.f32 %v111, %v112
    %114 = vst [vmem:[#allocation7] sm:$0xff] %v113
    // Predicated region
    $region22: #{tpu_custom_call.1} parent=1 // pred_check
      _
    $region23: #{tpu_custom_call.1} parent=1 // pred_check_branch
      %116 = sbr.rel (0) target = $region25
    $region24: #{tpu_custom_call.1} parent=1 // pred_region
      %s118 = ssub.s32 128, 128
      %119 = vsyncadd [#allocation4], %s118
      %s121 = sshll.u32 [#allocation7], 4
      %s122 = int_to_ptr.vmem [resolvable:$true] %s121
      %124 = dma.vmem_to_hbm [thread:$0]  %s122, 128, %s2, [#allocation4]
    $region25: #{tpu_custom_call.1} parent=1 // pred_fallthru
      _
    // Predicated region
    $region26: #{tpu_custom_call.1} parent=1 // pred_check
      _
    $region27: #{tpu_custom_call.1} parent=1 // pred_check_branch
      %126 = sbr.rel (0) target = $region29
    $region28: #{tpu_custom_call.1} parent=1 // pred_region
      %127 = dma.done [#allocation4], 128
    $region29: #{tpu_custom_call.1} parent=1 // pred_fallthru
      _
    %128 = vsyncpa [#allocation3], 1
    %129 = vsyncpa [#allocation6], 1
    %130 = vsyncpa [#allocation4], 1

</llo_original>
